<compile_context>
chip_gen: v5e
topology: v5e:2x2
jax: 0.10.0
libtpu: 0.0.40
codegen_flags: <defaults>
</compile_context>

<pallas_src>
import functools

import jax
import jax.numpy as jnp
from jax.experimental import pallas as pl
from jax.experimental.pallas import tpu as pltpu


def _class_block_kernel(x_ref, w1_ref, g_ref, be_ref, w2_ref, b2_ref,
                        out_ref, *maybe_acc, eps, relu, negative_slope,
                        inv_b, mxu_reduce):
    # Accumulate directly into the resident f32 output block when possible.
    acc_ref = maybe_acc[0] if maybe_acc else out_ref
    j = pl.program_id(1)  # bottleneck (reduction) axis — innermost

    @pl.when(j == 0)
    def _init():
        acc_ref[...] = jnp.zeros_like(acc_ref)

    # ---- Linear 1 on this bottleneck tile: (B, D) @ (D, TNB) -> (B, TNB) ----
    # Native (bf16) MXU operands, f32 accumulation.
    h = jnp.dot(x_ref[...], w1_ref[...], preferred_element_type=jnp.float32)
    # b1 is intentionally omitted: training-mode BN subtracts the per-feature
    # batch mean, so the Linear bias cancels exactly.  (It would have to be
    # re-added if a bnorm=False / return_f=True path were implemented.)

    # ---- BatchNorm1d (training mode: biased batch stats, per feature) ----
    if mxu_reduce:  # large-B path: batch reduction on the MXU (it has slack)
        ones = jnp.ones((1, h.shape[0]), jnp.float32)
        mean = jnp.dot(ones, h, preferred_element_type=jnp.float32) * inv_b
        d = h - mean
        var = jnp.dot(ones, d * d, preferred_element_type=jnp.float32) * inv_b
    else:
        mean = jnp.sum(h, axis=0, keepdims=True) * inv_b        # (1, TNB)
        d = h - mean
        var = jnp.sum(d * d, axis=0, keepdims=True) * inv_b     # biased (÷B)

    # gamma fused into the rsqrt: one (1, TNB) mul instead of a (B, TNB) mul.
    scale = g_ref[...].astype(jnp.float32) * jax.lax.rsqrt(var + eps)
    hn = d * scale + be_ref[...].astype(jnp.float32)

    if relu:  # static Python flag -> dead-code-eliminated when False
        hn = jnp.where(hn >= 0, hn, negative_slope * hn)

    # ---- Classifier Linear: accumulate over bottleneck tiles ----
    acc_ref[...] += jnp.dot(hn.astype(w2_ref.dtype), w2_ref[...],
                            preferred_element_type=jnp.float32)

    @pl.when(j == pl.num_programs(1) - 1)
    def _finalize():
        out_ref[...] = (acc_ref[...] + b2_ref[...].astype(jnp.float32)
                        ).astype(out_ref.dtype)


def class_block_forward(x, w1, b1, gamma, beta, w2, b2, *,
                        eps=1e-5, relu=False, negative_slope=0.1,
                        block_nb=None, block_c=None, mxu_dtype=jnp.bfloat16):
    """Fused ClassBlock forward (training-mode BN, droprate=0).

    x:     (B, input_dim)
    w1:    (input_dim, num_bottleneck)   (already transposed vs torch Linear)
    b1:    (num_bottleneck,)             accepted but cancels through training BN
    gamma: (num_bottleneck,)             BatchNorm1d weight
    beta:  (num_bottleneck,)             BatchNorm1d bias
    w2:    (num_bottleneck, class_num)   (already transposed vs torch Linear)
    b2:    (class_num,)
    returns logits: (B, class_num)
    """
    del b1  # exactly cancelled by training-mode batch-mean subtraction
    B, D = x.shape
    Dw, NB = w1.shape
    NBw, C = w2.shape
    assert Dw == D and NBw == NB

    out_dtype = x.dtype
    if mxu_dtype is not None:
        x = x.astype(mxu_dtype)
        w1 = w1.astype(mxu_dtype)
        w2 = w2.astype(mxu_dtype)
    itemsize = jnp.dtype(x.dtype).itemsize

    # ---- Pad class dim to a lane multiple (zero-padded, sliced back) ----
    C_pad = max(128, ((C + 127) // 128) * 128)
    if C_pad != C:
        w2 = jnp.pad(w2, ((0, 0), (0, C_pad - C)))
        b2 = jnp.pad(b2, (0, C_pad - C))

    # ---- Class-tile size (multiple of 128 dividing C_pad) ----
    if block_c is None:
        block_c = C_pad
        if C_pad > 512:
            for cand in (512, 384, 256, 128):
                if C_pad % cand == 0:
                    block_c = cand
                    break
    elif C_pad % block_c != 0 or block_c % 128 != 0:
        block_c = C_pad

    # ---- Bottleneck tile: largest that fits a conservative VMEM budget ----
    def _footprint(t_nb):
        return (D * t_nb * itemsize * 2            # W1 tile, double-buffered
                + t_nb * block_c * itemsize * 2    # W2 tile, double-buffered
                + B * D * itemsize * 2             # resident x
                + 3 * B * t_nb * 4                 # live f32 temporaries
                + 2 * B * block_c * 4)             # output / accumulator

    if block_nb is None:
        budget = 40 * 1024 * 1024
        candidates = [NB] + [c for c in (2048, 1024, 512, 256, 128) if NB % c == 0]
        block_nb = candidates[-1]
        for cand in candidates:
            if _footprint(cand) <= budget:
                block_nb = cand
                break
    elif NB % block_nb != 0 or (block_nb != NB and block_nb % 128 != 0):
        block_nb = NB

    grid = (C_pad // block_c, NB // block_nb)

    # Present 1-D parameter vectors as (1, N) lane-major slabs.
    g_2 = gamma.reshape(1, NB)
    be_2 = beta.reshape(1, NB)
    b2_2 = b2.reshape(1, C_pad)

    acc_in_out = (out_dtype == jnp.float32)
    scratch_shapes = [] if acc_in_out else [pltpu.VMEM((B, block_c), jnp.float32)]

    kernel = functools.partial(
        _class_block_kernel,
        eps=float(eps),
        relu=bool(relu),
        negative_slope=float(negative_slope),
        inv_b=1.0 / float(B),          # hoisted compile-time reciprocal
        mxu_reduce=(B >= 128),         # MXU batch-sums only when B is large
    )

    vmem_limit = int(min(max(2 * _footprint(block_nb), 32 * 1024 * 1024),
                         64 * 1024 * 1024))

    out = pl.pallas_call(
        kernel,
        out_shape=jax.ShapeDtypeStruct((B, C_pad), out_dtype),
        grid_spec=pltpu.PrefetchScalarGridSpec(
            num_scalar_prefetch=0,
            grid=grid,
            in_specs=[
                pl.BlockSpec((B, D), lambda i, j: (0, 0)),           # x (resident)
                pl.BlockSpec((D, block_nb), lambda i, j: (0, j)),    # W1 tile
                pl.BlockSpec((1, block_nb), lambda i, j: (0, j)),    # gamma tile
                pl.BlockSpec((1, block_nb), lambda i, j: (0, j)),    # beta tile
                pl.BlockSpec((block_nb, block_c), lambda i, j: (j, i)),  # W2 tile
                pl.BlockSpec((1, block_c), lambda i, j: (0, i)),     # b2 tile
            ],
            out_specs=pl.BlockSpec((B, block_c), lambda i, j: (0, i)),
            scratch_shapes=scratch_shapes,
        ),
        compiler_params=pltpu.CompilerParams(
            dimension_semantics=("parallel", "arbitrary"),
            vmem_limit_bytes=vmem_limit),
    )(x, w1, g_2, be_2, w2, b2_2)

    return out[:, :C] if C_pad != C else out


def _reference_forward(x, w1, b1, gamma, beta, w2, b2,
                       eps=1e-5, relu=False, negative_slope=0.1):
    """Pure-JAX f32 reference mirroring PyTorch ClassBlock (training BN, droprate=0)."""
    h = x.astype(jnp.float32) @ w1.astype(jnp.float32) + b1.astype(jnp.float32)
    mean = jnp.mean(h, axis=0, keepdims=True)
    var = jnp.mean((h - mean) ** 2, axis=0, keepdims=True)   # biased, like BN
    hn = (h - mean) / jnp.sqrt(var + eps) * gamma + beta
    if relu:
        hn = jnp.where(hn >= 0, hn, negative_slope * hn)
    return hn @ w2.astype(jnp.float32) + b2.astype(jnp.float32)


if __name__ == "__main__":
    key = jax.random.PRNGKey(0)
    k_x, k_w1, k_b1, k_g, k_be, k_w2, k_b2 = jax.random.split(key, 7)

    # Small shapes consistent with ClassBlock(input_dim, class_num, droprate=0,
    # num_bottleneck=256): batch=8, input_dim=64, bottleneck=256, classes=16.
    B, D, NB, C = 8, 64, 256, 16

    x = jax.random.normal(k_x, (B, D), dtype=jnp.float32)
    w1 = jax.random.normal(k_w1, (D, NB), dtype=jnp.float32) * (2.0 / D) ** 0.5
    b1 = jax.random.normal(k_b1, (NB,), dtype=jnp.float32) * 0.01
    gamma = 1.0 + 0.1 * jax.random.normal(k_g, (NB,), dtype=jnp.float32)
    beta = 0.1 * jax.random.normal(k_be, (NB,), dtype=jnp.float32)
    w2 = jax.random.normal(k_w2, (NB, C), dtype=jnp.float32) * 0.001
    b2 = 0.01 * jax.random.normal(k_b2, (C,), dtype=jnp.float32)

    out = class_block_forward(x, w1, b1, gamma, beta, w2, b2)
    out = jax.block_until_ready(out)

    ref = _reference_forward(x, w1, b1, gamma, beta, w2, b2)

    assert out.shape == (B, C), out.shape
    # bf16 MXU operands -> compare against f32 reference with a loose tolerance.
    max_err = float(jnp.max(jnp.abs(out.astype(jnp.float32) - ref)))
    assert jnp.allclose(out.astype(jnp.float32), ref, atol=1e-2, rtol=5e-2), (
        "mismatch vs reference: max abs err = %g" % max_err)

    print("KERNEL_OK")
</pallas_src>

<mosaic_0001>
module attributes {stable_mosaic.version = 11 : i64} {
  func.func @_class_block_kernel(%arg0: i32, %arg1: i32, %arg2: memref<8x64xbf16, #tpu.memory_space<vmem>>, %arg3: memref<64x256xbf16, #tpu.memory_space<vmem>>, %arg4: memref<1x256xf32, #tpu.memory_space<vmem>>, %arg5: memref<1x256xf32, #tpu.memory_space<vmem>>, %arg6: memref<256x128xbf16, #tpu.memory_space<vmem>>, %arg7: memref<1x128xf32, #tpu.memory_space<vmem>>, %arg8: memref<8x128xf32, #tpu.memory_space<vmem>>) attributes {dimension_semantics = [#tpu.dimension_semantics<parallel>, #tpu.dimension_semantics<arbitrary>], iteration_bounds = array<i64: 1, 1>, scalar_prefetch = 0 : i64, scratch_operands = 0 : i64, tpu.core_type = #tpu.core_type<tc>, window_params = [{pipeline_mode = #tpu.pipeline_mode<synchronous>, transform_indices = @transform_0, window_bounds = array<i64: 8, 64>}, {transform_indices = @transform_1, window_bounds = array<i64: 64, 256>}, {transform_indices = @transform_2, window_bounds = array<i64: 1, 256>}, {transform_indices = @transform_3, window_bounds = array<i64: 1, 256>}, {transform_indices = @transform_4, window_bounds = array<i64: 256, 128>}, {transform_indices = @transform_5, window_bounds = array<i64: 1, 128>}, {transform_indices = @transform_6, window_bounds = array<i64: 8, 128>}]} {
    %c0_i32 = arith.constant 0 : i32
    %0 = arith.cmpi eq, %arg1, %c0_i32 : i32
    %1 = arith.extui %0 : i1 to i32
    %c0_i32_0 = arith.constant 0 : i32
    %2 = arith.cmpi ne, %1, %c0_i32_0 : i32
    scf.if %2 {
      %cst_22 = arith.constant 0.000000e+00 : f32
      %36 = vector.broadcast %cst_22 : f32 to vector<8x128xf32>
      %c0_23 = arith.constant 0 : index
      %c0_24 = arith.constant 0 : index
      %37 = vector.load %arg8[%c0_23, %c0_24] : memref<8x128xf32, #tpu.memory_space<vmem>>, vector<8x128xf32>
      tpu.vector_store %arg8[%c0_23, %c0_24], %36 {strides = array<i32>} : memref<8x128xf32, #tpu.memory_space<vmem>>, vector<8x128xf32>,
    } else {
    }
    %c0 = arith.constant 0 : index
    %c0_1 = arith.constant 0 : index
    %3 = vector.load %arg2[%c0, %c0_1] : memref<8x64xbf16, #tpu.memory_space<vmem>>, vector<8x64xbf16>
    %c0_2 = arith.constant 0 : index
    %c0_3 = arith.constant 0 : index
    %4 = vector.load %arg3[%c0_2, %c0_3] : memref<64x256xbf16, #tpu.memory_space<vmem>>, vector<64x256xbf16>
    %cst = arith.constant dense<0.000000e+00> : vector<8x256xf32>
    %5 = tpu.matmul %3, %4, %cst {dimension_numbers = #tpu.dot_dimension_numbers<[1], [0], [0], [1], [0, 0, 1, 1], [], []>} : vector<8x64xbf16>, vector<64x256xbf16>, vector<8x256xf32> -> vector<8x256xf32>
    %cst_4 = arith.constant dense<0.000000e+00> : vector<256xf32>
    %6 = vector.multi_reduction <add>, %5, %cst_4 [0] : vector<8x256xf32> to vector<256xf32>
    %7 = vector.shape_cast %6 : vector<256xf32> to vector<1x256xf32>
    %cst_5 = arith.constant 1.250000e-01 : f32
    %8 = vector.broadcast %cst_5 : f32 to vector<1x256xf32>
    %9 = arith.mulf %7, %8 : vector<1x256xf32>
    %10 = vector.broadcast %9 : vector<1x256xf32> to vector<8x256xf32>
    %11 = arith.subf %5, %10 : vector<8x256xf32>
    %12 = arith.mulf %11, %11 : vector<8x256xf32>
    %cst_6 = arith.constant dense<0.000000e+00> : vector<256xf32>
    %13 = vector.multi_reduction <add>, %12, %cst_6 [0] : vector<8x256xf32> to vector<256xf32>
    %14 = vector.shape_cast %13 : vector<256xf32> to vector<1x256xf32>
    %cst_7 = arith.constant 1.250000e-01 : f32
    %15 = vector.broadcast %cst_7 : f32 to vector<1x256xf32>
    %16 = arith.mulf %14, %15 : vector<1x256xf32>
    %c0_8 = arith.constant 0 : index
    %c0_9 = arith.constant 0 : index
    %17 = vector.load %arg4[%c0_8, %c0_9] : memref<1x256xf32, #tpu.memory_space<vmem>>, vector<1x256xf32>
    %cst_10 = arith.constant 9.99999974E-6 : f32
    %18 = vector.broadcast %cst_10 : f32 to vector<1x256xf32>
    %19 = arith.addf %16, %18 : vector<1x256xf32>
    %20 = math.rsqrt %19 : vector<1x256xf32>
    %21 = arith.mulf %17, %20 : vector<1x256xf32>
    %22 = vector.broadcast %21 : vector<1x256xf32> to vector<8x256xf32>
    %23 = arith.mulf %11, %22 : vector<8x256xf32>
    %c0_11 = arith.constant 0 : index
    %c0_12 = arith.constant 0 : index
    %24 = vector.load %arg5[%c0_11, %c0_12] : memref<1x256xf32, #tpu.memory_space<vmem>>, vector<1x256xf32>
    %25 = vector.broadcast %24 : vector<1x256xf32> to vector<8x256xf32>
    %26 = arith.addf %23, %25 : vector<8x256xf32>
    %c0_13 = arith.constant 0 : index
    %c0_14 = arith.constant 0 : index
    %27 = vector.load %arg8[%c0_13, %c0_14] : memref<8x128xf32, #tpu.memory_space<vmem>>, vector<8x128xf32>
    %28 = arith.truncf %26 : vector<8x256xf32> to vector<8x256xbf16>
    %c0_15 = arith.constant 0 : index
    %c0_16 = arith.constant 0 : index
    %29 = vector.load %arg6[%c0_15, %c0_16] : memref<256x128xbf16, #tpu.memory_space<vmem>>, vector<256x128xbf16>
    %cst_17 = arith.constant dense<0.000000e+00> : vector<8x128xf32>
    %30 = tpu.matmul %28, %29, %cst_17 {dimension_numbers = #tpu.dot_dimension_numbers<[1], [0], [0], [1], [0, 0, 1, 1], [], []>} : vector<8x256xbf16>, vector<256x128xbf16>, vector<8x128xf32> -> vector<8x128xf32>
    %31 = arith.addf %27, %30 : vector<8x128xf32>
    %c0_18 = arith.constant 0 : index
    %c0_19 = arith.constant 0 : index
    %32 = vector.load %arg8[%c0_18, %c0_19] : memref<8x128xf32, #tpu.memory_space<vmem>>, vector<8x128xf32>
    tpu.vector_store %arg8[%c0_18, %c0_19], %31 {strides = array<i32>} : memref<8x128xf32, #tpu.memory_space<vmem>>, vector<8x128xf32>,
    %c0_i32_20 = arith.constant 0 : i32
    %33 = arith.cmpi eq, %arg1, %c0_i32_20 : i32
    %34 = arith.extui %33 : i1 to i32
    %c0_i32_21 = arith.constant 0 : i32
    %35 = arith.cmpi ne, %34, %c0_i32_21 : i32
    scf.if %35 {
      %c0_22 = arith.constant 0 : index
      %c0_23 = arith.constant 0 : index
      %36 = vector.load %arg8[%c0_22, %c0_23] : memref<8x128xf32, #tpu.memory_space<vmem>>, vector<8x128xf32>
      %c0_24 = arith.constant 0 : index
      %c0_25 = arith.constant 0 : index
      %37 = vector.load %arg7[%c0_24, %c0_25] : memref<1x128xf32, #tpu.memory_space<vmem>>, vector<1x128xf32>
      %38 = vector.broadcast %37 : vector<1x128xf32> to vector<8x128xf32>
      %39 = arith.addf %36, %38 : vector<8x128xf32>
      %c0_26 = arith.constant 0 : index
      %c0_27 = arith.constant 0 : index
      %40 = vector.load %arg8[%c0_26, %c0_27] : memref<8x128xf32, #tpu.memory_space<vmem>>, vector<8x128xf32>
      tpu.vector_store %arg8[%c0_26, %c0_27], %39 {strides = array<i32>} : memref<8x128xf32, #tpu.memory_space<vmem>>, vector<8x128xf32>,
    } else {
    }
    return
  }
  func.func @transform_0(%arg0: i32, %arg1: i32) -> (i32, i32) {
    %c0_i32 = arith.constant 0 : i32
    %c0_i32_0 = arith.constant 0 : i32
    %c0_i32_1 = arith.constant 0 : i32
    return %c0_i32, %c0_i32_0 : i32, i32
  }
  func.func @transform_1(%arg0: i32, %arg1: i32) -> (i32, i32) {
    %c0_i32 = arith.constant 0 : i32
    %c0_i32_0 = arith.constant 0 : i32
    return %c0_i32, %arg1 : i32, i32
  }
  func.func @transform_2(%arg0: i32, %arg1: i32) -> (i32, i32) {
    %c0_i32 = arith.constant 0 : i32
    %c0_i32_0 = arith.constant 0 : i32
    return %c0_i32, %arg1 : i32, i32
  }
  func.func @transform_3(%arg0: i32, %arg1: i32) -> (i32, i32) {
    %c0_i32 = arith.constant 0 : i32
    %c0_i32_0 = arith.constant 0 : i32
    return %c0_i32, %arg1 : i32, i32
  }
  func.func @transform_4(%arg0: i32, %arg1: i32) -> (i32, i32) {
    %c0_i32 = arith.constant 0 : i32
    return %arg1, %arg0 : i32, i32
  }
  func.func @transform_5(%arg0: i32, %arg1: i32) -> (i32, i32) {
    %c0_i32 = arith.constant 0 : i32
    %c0_i32_0 = arith.constant 0 : i32
    return %c0_i32, %arg0 : i32, i32
  }
  func.func @transform_6(%arg0: i32, %arg1: i32) -> (i32, i32) {
    %c0_i32 = arith.constant 0 : i32
    %c0_i32_0 = arith.constant 0 : i32
    return %c0_i32, %arg0 : i32, i32
  }
}

</mosaic_0001>

<llo_original>
// kernel: tpu_custom_call.1
$region0: #{tpu_custom_call.1}
  #allocation0 [shape = 'u32[]', space=smem, size = 0x4, offset = 0x4, fixed_abs, tag = 'smem constant byte address 0x4 - core index']
  #allocation1 [shape = 'u32[72,128]{1,0:T(1,128)}', space=vmem, size = 0x9000, scoped, tag = 'internal scratch']
  %s0 = inlined_call_operand.hbm [shape: bf16[8,64], index: 0, kind: input, shape index: {}]
  %s1 = inlined_call_operand.hbm [shape: bf16[64,256], index: 1, kind: input, shape index: {}]
  %s2 = inlined_call_operand.hbm [shape: f32[1,256], index: 2, kind: input, shape index: {}]
  %s3 = inlined_call_operand.vmem [shape: f32[1,256], index: 3, kind: input, shape index: {}]
  %s4 = inlined_call_operand.hbm [shape: bf16[256,128], index: 4, kind: input, shape index: {}]
  %s5 = inlined_call_operand.vmem [shape: f32[1,128], index: 5, kind: input, shape index: {}]
  %s6 = inlined_call_operand.hbm [shape: f32[8,128], index: 6, kind: output, shape index: {}]
  %s7 = sld [smem:[#allocation0]]
  $region58: #{tpu_custom_call.1} parent=0
    _
  %s9 = ssub.s32 1, %s7
  %s10 = scalar_select 0, %s9, %s7
  $region1: #{tpu_custom_call.1} parent=0
    #allocation2 [shape = 'u8[2048]{0}', space=vmem, size = 0x800, scoped, tag = 'input window, operand 0, single buffered']
    #allocation3 [shape = 's32[1]{0}', space=sflag, size = 0x4, scoped, tag = 'scoped memory for tpu_custom_call.1']
    #allocation4 [shape = 's32[1]{0}', space=sflag, size = 0x4, scoped, tag = 'scoped memory for tpu_custom_call.1']
    #allocation5 [shape = 'u8[32768]{0}', space=vmem, size = 0x8000, scoped, tag = 'input window, operand 1, single buffered']
    #allocation6 [shape = 's32[1]{0}', space=sflag, size = 0x4, scoped, tag = 'scoped memory for tpu_custom_call.1']
    #allocation7 [shape = 'u8[1024]{0}', space=vmem, size = 0x400, scoped, tag = 'input window, operand 2, single buffered']
    #allocation8 [shape = 'u8[65536]{0}', space=vmem, size = 0x10000, scoped, tag = 'input window, operand 4, single buffered']
    #allocation9 [shape = 's32[1]{0}', space=sflag, size = 0x4, scoped, tag = 'scoped memory for tpu_custom_call.1']
    #allocation10 [shape = 'u8[4096]{0}', space=vmem, size = 0x1000, scoped, tag = 'output window, operand 0, single buffered']
    %11 = vsyncpa [#allocation3], 0
    %12 = vsyncpa [#allocation6], 0
    %13 = vsyncpa [#allocation9], 0
    %14 = vsyncpa [#allocation4], 0
    // Predicated region
    $region2: #{tpu_custom_call.1} parent=1 // pred_check
      _
    $region3: #{tpu_custom_call.1} parent=1 // pred_check_branch
      %16 = sbr.rel (0) target = $region5
    $region4: #{tpu_custom_call.1} parent=1 // pred_region
      %18 = vsyncadd [#allocation3], 0
      %s20 = sshll.u32 %s0, 4
      %s21 = int_to_ptr.hbm [resolvable:$true] %s20
      %s22 = sshll.u32 [#allocation2], 4
      %s23 = int_to_ptr.vmem [resolvable:$true] %s22
      %25 = dma.hbm_to_vmem [thread:$0]  %s21, 64, %s23, [#allocation3]
    $region5: #{tpu_custom_call.1} parent=1 // pred_fallthru
      _
    // Predicated region
    $region6: #{tpu_custom_call.1} parent=1 // pred_check
      _
    $region7: #{tpu_custom_call.1} parent=1 // pred_check_branch
      %27 = sbr.rel (0) target = $region9
    $region8: #{tpu_custom_call.1} parent=1 // pred_region
      %29 = vsyncadd [#allocation6], 0
      %s30 = sshll.u32 %s1, 4
      %s31 = int_to_ptr.hbm [resolvable:$true] %s30
      %s32 = sshll.u32 [#allocation5], 4
      %s33 = int_to_ptr.vmem [resolvable:$true] %s32
      %38 = dma.hbm_to_vmem [thread:$0]  %s31, 1024, %s33, [#allocation6], 128, 128, 8
    $region9: #{tpu_custom_call.1} parent=1 // pred_fallthru
      _
    // Predicated region
    $region10: #{tpu_custom_call.1} parent=1 // pred_check
      _
    $region11: #{tpu_custom_call.1} parent=1 // pred_check_branch
      %40 = sbr.rel (0) target = $region13
    $region12: #{tpu_custom_call.1} parent=1 // pred_region
      %42 = vsyncadd [#allocation6], 0
      %s44 = sshll.u32 %s2, 4
      %s45 = int_to_ptr.hbm [resolvable:$true] %s44
      %s46 = sshll.u32 [#allocation7], 4
      %s47 = int_to_ptr.vmem [resolvable:$true] %s46
      %49 = dma.hbm_to_vmem [thread:$0]  %s45, 32, %s47, [#allocation6]
    $region13: #{tpu_custom_call.1} parent=1 // pred_fallthru
      _
    // Predicated region
    $region14: #{tpu_custom_call.1} parent=1 // pred_check
      _
    $region15: #{tpu_custom_call.1} parent=1 // pred_check_branch
      %51 = sbr.rel (0) target = $region17
    $region16: #{tpu_custom_call.1} parent=1 // pred_region
      _
    $region17: #{tpu_custom_call.1} parent=1 // pred_fallthru
      _
    // Predicated region
    $region18: #{tpu_custom_call.1} parent=1 // pred_check
      _
    $region19: #{tpu_custom_call.1} parent=1 // pred_check_branch
      %53 = sbr.rel (0) target = $region21
    $region20: #{tpu_custom_call.1} parent=1 // pred_region
      %55 = vsyncadd [#allocation9], 0
      %s56 = sshll.u32 %s4, 4
      %s57 = int_to_ptr.hbm [resolvable:$true] %s56
      %s58 = sshll.u32 [#allocation8], 4
      %s59 = int_to_ptr.vmem [resolvable:$true] %s58
      %64 = dma.hbm_to_vmem [thread:$0]  %s57, 2048, %s59, [#allocation9], 64, 64, 4
    $region21: #{tpu_custom_call.1} parent=1 // pred_fallthru
      _
    // Predicated region
    $region22: #{tpu_custom_call.1} parent=1 // pred_check
      _
    $region23: #{tpu_custom_call.1} parent=1 // pred_check_branch
      %66 = sbr.rel (0) target = $region25
    $region24: #{tpu_custom_call.1} parent=1 // pred_region
      _
    $region25: #{tpu_custom_call.1} parent=1 // pred_fallthru
      _
    // Predicated region
    $region26: #{tpu_custom_call.1} parent=1 // pred_check
      _
    $region27: #{tpu_custom_call.1} parent=1 // pred_check_branch
      %68 = sbr.rel (0) target = $region29
    $region28: #{tpu_custom_call.1} parent=1 // pred_region
      %70 = dma.done [#allocation3], 64
    $region29: #{tpu_custom_call.1} parent=1 // pred_fallthru
      _
    // Predicated region
    $region30: #{tpu_custom_call.1} parent=1 // pred_check
      _
    $region31: #{tpu_custom_call.1} parent=1 // pred_check_branch
      %72 = sbr.rel (0) target = $region33
    $region32: #{tpu_custom_call.1} parent=1 // pred_region
      %74 = dma.done [#allocation6], 1024
    $region33: #{tpu_custom_call.1} parent=1 // pred_fallthru
      _
    // Predicated region
    $region34: #{tpu_custom_call.1} parent=1 // pred_check
      _
    $region35: #{tpu_custom_call.1} parent=1 // pred_check_branch
      %76 = sbr.rel (0) target = $region37
    $region36: #{tpu_custom_call.1} parent=1 // pred_region
      %78 = dma.done [#allocation6], 32
    $region37: #{tpu_custom_call.1} parent=1 // pred_fallthru
      _
    // Predicated region
    $region38: #{tpu_custom_call.1} parent=1 // pred_check
      _
    $region39: #{tpu_custom_call.1} parent=1 // pred_check_branch
      %80 = sbr.rel (0) target = $region41
    $region40: #{tpu_custom_call.1} parent=1 // pred_region
      %82 = dma.done [#allocation9], 2048
    $region41: #{tpu_custom_call.1} parent=1 // pred_fallthru
      _
    %p84 = scmp.eq.s32.totalorder 0, 0
    // Predicated region
    $region42: #{tpu_custom_call.1} parent=1 // pred_check
      %p85 = pneg %p84
    $region43: #{tpu_custom_call.1} parent=1 // pred_check_branch
      %87 = sbr.rel (%p85) target = $region45
    $region44: #{tpu_custom_call.1} parent=1 // pred_region
      %88 = vst [vmem:[#allocation10] sm:$0xff] 0.0
    $region45: #{tpu_custom_call.1} parent=1 // pred_fallthru
      _
    %v89 = vld [vmem:[#allocation2] sm:$0xf]
    %v90 = vld [vmem:[#allocation5] sm:$0xff]
    %v91 = vld [vmem:[#allocation5 + $0x8] sm:$0xff]
    %v92 = vld [vmem:[#allocation5 + $0x10] sm:$0xff]
    %v93 = vld [vmem:[#allocation5 + $0x18] sm:$0xff]
    %v94 = vld [vmem:[#allocation5 + $0x20] sm:$0xff]
    %v95 = vld [vmem:[#allocation5 + $0x28] sm:$0xff]
    %v96 = vld [vmem:[#allocation5 + $0x30] sm:$0xff]
    %v97 = vld [vmem:[#allocation5 + $0x38] sm:$0xff]
    %v106 = vunpack.c.l.b16 %v90
    %v107 = vunpack.c.h.b16 %v90
    %v108 = vunpack.c.l.b16 %v91
    %v109 = vunpack.c.h.b16 %v91
    %v110 = vunpack.c.l.b16 %v92
    %v111 = vunpack.c.h.b16 %v92
    %v112 = vunpack.c.l.b16 %v93
    %v113 = vunpack.c.h.b16 %v93
    %v114 = vunpack.c.l.b16 %v94
    %v115 = vunpack.c.h.b16 %v94
    %v116 = vunpack.c.l.b16 %v95
    %v117 = vunpack.c.h.b16 %v95
    %v118 = vunpack.c.l.b16 %v96
    %v119 = vunpack.c.h.b16 %v96
    %v120 = vunpack.c.l.b16 %v97
    %v121 = vunpack.c.h.b16 %v97
    %v122 = vpack.c.b16 %v108, %v106
    %v123 = vpack.c.b16 %v109, %v107
    %v124 = vpack.c.b16 %v112, %v110
    %v125 = vpack.c.b16 %v113, %v111
    %v126 = vpack.c.b16 %v116, %v114
    %v127 = vpack.c.b16 %v117, %v115
    %v128 = vpack.c.b16 %v120, %v118
    %v129 = vpack.c.b16 %v121, %v119
    %vm138 = vcmask 523264
    %v140 = vsel %vm138, %v89, 0
    %142 = vmatpush.bf16.msra.mxu0 0
    %143 = vmatpush.bf16.msra.mxu0 0
    %144 = vmatpush.bf16.msra.mxu0 0
    %145 = vmatpush.bf16.msra.mxu0 0
    %146 = vmatpush.bf16.msra.mxu0 %v128
    %147 = vmatpush.bf16.msra.mxu0 %v126
    %148 = vmatpush.bf16.msra.mxu0 %v124
    %149 = vmatpush.bf16.msra.mxu0 %v122
    %150 = vmatmul.bf16.gmra.mxu0 %v140
    %v151 = vpop.f32.mrf.mxu0
    %v152 = vadd.f32 0.0, %v151
    %v153 = vpop.f32.mrf.mxu0
    %154 = vdwg.mxu0
    %155 = vmatpush.bf16.msra.mxu0 0
    %156 = vmatpush.bf16.msra.mxu0 0
    %157 = vmatpush.bf16.msra.mxu0 0
    %158 = vmatpush.bf16.msra.mxu0 0
    %159 = vmatpush.bf16.msra.mxu0 %v129
    %160 = vmatpush.bf16.msra.mxu0 %v127
    %161 = vmatpush.bf16.msra.mxu0 %v125
    %162 = vmatpush.bf16.msra.mxu0 %v123
    %163 = vmatmul.bf16.gmra.mxu0 %v140
    %v164 = vpop.f32.mrf.mxu0
    %v165 = vadd.f32 0.0, %v164
    %v166 = vpop.f32.mrf.mxu0
    %167 = vdwg.mxu0
    %v168 = vrot.slane %v152, 4
    %v169 = vadd.f32 %v152, %v168
    %v170 = vrot.slane %v169, 2
    %v171 = vadd.f32 %v169, %v170
    %v172 = vrot.slane %v171, 1
    %v173 = vadd.f32 %v171, %v172
    %v174 = vrot.slane %v165, 4
    %v175 = vadd.f32 %v165, %v174
    %v176 = vrot.slane %v175, 2
    %v177 = vadd.f32 %v175, %v176
    %v178 = vrot.slane %v177, 1
    %v179 = vadd.f32 %v177, %v178
    %v180 = vmul.f32 %v173, 0.125
    %v181 = vmul.f32 %v179, 0.125
    %v182 = vsub.f32 %v152, %v180
    %v183 = vsub.f32 %v165, %v181
    %v184 = vmul.f32 %v182, %v182
    %v185 = vmul.f32 %v183, %v183
    %v186 = vrot.slane %v184, 4
    %v187 = vadd.f32 %v184, %v186
    %v188 = vrot.slane %v187, 2
    %v189 = vadd.f32 %v187, %v188
    %v190 = vrot.slane %v189, 1
    %v191 = vadd.f32 %v189, %v190
    %v192 = vrot.slane %v185, 4
    %v193 = vadd.f32 %v185, %v192
    %v194 = vrot.slane %v193, 2
    %v195 = vadd.f32 %v193, %v194
    %v196 = vrot.slane %v195, 1
    %v197 = vadd.f32 %v195, %v196
    %v198 = vmul.f32 %v191, 0.125
    %v199 = vmul.f32 %v197, 0.125
    %v200 = vld [vmem:[#allocation7] sm:$0x3]
    %v201 = vadd.f32 %v198, 1e-05
    %v202 = vadd.f32 %v199, 1e-05
    %v203 = vrsqrt.pop %v201
    %v204 = vmul.f32 %v203, %v201
    %v205 = vmul.f32 %v204, %v203
    %v206 = vmul.f32 0.5, %v205
    %v207 = vsub.f32 1.5, %v206
    %v208 = vmul.f32 %v203, %v207
    %vm209 = vweird.f32 %v201
    %vm210 = vweird.f32 %v203
    %vm211 = vmor %vm209, %vm210
    %v212 = vsel %vm211, %v203, %v208
    %v213 = vrsqrt.pop %v202
    %v214 = vmul.f32 %v213, %v202
    %v215 = vmul.f32 %v214, %v213
    %v216 = vmul.f32 0.5, %v215
    %v217 = vsub.f32 1.5, %v216
    %v218 = vmul.f32 %v213, %v217
    %vm219 = vweird.f32 %v202
    %vm220 = vweird.f32 %v213
    %vm221 = vmor %vm219, %vm220
    %v222 = vsel %vm221, %v213, %v218
    %v225 = vrot.slane %v222, 7
    %vm226 = vcmask 1040384
    %v227 = vsel %vm226, %v212, %v225
    %v229 = vmul.f32 %v200, %v227
    %v231 = vperm.slane %v229, 0
    %v232 = vperm.slane %v229, 1
    %v235 = vmul.f32 %v182, %v231
    %v236 = vmul.f32 %v183, %v232
    %v237 = vld [vmem:[%s3] sm:$0x3]
    %v239 = vperm.slane %v237, 0
    %v240 = vperm.slane %v237, 1
    %v243 = vadd.f32 %v235, %v239
    %v244 = vadd.f32 %v236, %v240
    %v245 = vld [vmem:[#allocation10] sm:$0xff]
    %v246 = vpack.c.bf16 %v243, %v243
    %v247 = vpack.c.bf16 %v244, %v244
    %v248 = vld [vmem:[#allocation8] sm:$0xf]
    %v249 = vld [vmem:[#allocation8 + $0x4] sm:$0xf]
    %v250 = vld [vmem:[#allocation8 + $0x8] sm:$0xf]
    %v251 = vld [vmem:[#allocation8 + $0xc] sm:$0xf]
    %v252 = vld [vmem:[#allocation8 + $0x10] sm:$0xf]
    %v253 = vld [vmem:[#allocation8 + $0x14] sm:$0xf]
    %v254 = vld [vmem:[#allocation8 + $0x18] sm:$0xf]
    %v255 = vld [vmem:[#allocation8 + $0x1c] sm:$0xf]
    %v256 = vld [vmem:[#allocation8 + $0x20] sm:$0xf]
    %v257 = vld [vmem:[#allocation8 + $0x24] sm:$0xf]
    %v258 = vld [vmem:[#allocation8 + $0x28] sm:$0xf]
    %v259 = vld [vmem:[#allocation8 + $0x2c] sm:$0xf]
    %v260 = vld [vmem:[#allocation8 + $0x30] sm:$0xf]
    %v261 = vld [vmem:[#allocation8 + $0x34] sm:$0xf]
    %v262 = vld [vmem:[#allocation8 + $0x38] sm:$0xf]
    %v263 = vld [vmem:[#allocation8 + $0x3c] sm:$0xf]
    %v264 = vld [vmem:[#allocation8 + $0x40] sm:$0xf]
    %v265 = vld [vmem:[#allocation8 + $0x44] sm:$0xf]
    %v266 = vld [vmem:[#allocation8 + $0x48] sm:$0xf]
    %v267 = vld [vmem:[#allocation8 + $0x4c] sm:$0xf]
    %v268 = vld [vmem:[#allocation8 + $0x50] sm:$0xf]
    %v269 = vld [vmem:[#allocation8 + $0x54] sm:$0xf]
    %v270 = vld [vmem:[#allocation8 + $0x58] sm:$0xf]
    %v271 = vld [vmem:[#allocation8 + $0x5c] sm:$0xf]
    %v272 = vld [vmem:[#allocation8 + $0x60] sm:$0xf]
    %v273 = vld [vmem:[#allocation8 + $0x64] sm:$0xf]
    %v274 = vld [vmem:[#allocation8 + $0x68] sm:$0xf]
    %v275 = vld [vmem:[#allocation8 + $0x6c] sm:$0xf]
    %v276 = vld [vmem:[#allocation8 + $0x70] sm:$0xf]
    %v277 = vld [vmem:[#allocation8 + $0x74] sm:$0xf]
    %v278 = vld [vmem:[#allocation8 + $0x78] sm:$0xf]
    %v279 = vld [vmem:[#allocation8 + $0x7c] sm:$0xf]
    %v312 = vunpack.c.l.b16 %v248
    %v313 = vunpack.c.l.b16 %v249
    %v314 = vunpack.c.l.b16 %v250
    %v315 = vunpack.c.l.b16 %v251
    %v316 = vunpack.c.l.b16 %v252
    %v317 = vunpack.c.l.b16 %v253
    %v318 = vunpack.c.l.b16 %v254
    %v319 = vunpack.c.l.b16 %v255
    %v320 = vunpack.c.l.b16 %v256
    %v321 = vunpack.c.l.b16 %v257
    %v322 = vunpack.c.l.b16 %v258
    %v323 = vunpack.c.l.b16 %v259
    %v324 = vunpack.c.l.b16 %v260
    %v325 = vunpack.c.l.b16 %v261
    %v326 = vunpack.c.l.b16 %v262
    %v327 = vunpack.c.l.b16 %v263
    %v328 = vunpack.c.l.b16 %v264
    %v329 = vunpack.c.l.b16 %v265
    %v330 = vunpack.c.l.b16 %v266
    %v331 = vunpack.c.l.b16 %v267
    %v332 = vunpack.c.l.b16 %v268
    %v333 = vunpack.c.l.b16 %v269
    %v334 = vunpack.c.l.b16 %v270
    %v335 = vunpack.c.l.b16 %v271
    %v336 = vunpack.c.l.b16 %v272
    %v337 = vunpack.c.l.b16 %v273
    %v338 = vunpack.c.l.b16 %v274
    %v339 = vunpack.c.l.b16 %v275
    %v340 = vunpack.c.l.b16 %v276
    %v341 = vunpack.c.l.b16 %v277
    %v342 = vunpack.c.l.b16 %v278
    %v343 = vunpack.c.l.b16 %v279
    %v344 = vpack.c.b16 %v313, %v312
    %v345 = vpack.c.b16 %v315, %v314
    %v346 = vpack.c.b16 %v317, %v316
    %v347 = vpack.c.b16 %v319, %v318
    %v348 = vpack.c.b16 %v321, %v320
    %v349 = vpack.c.b16 %v323, %v322
    %v350 = vpack.c.b16 %v325, %v324
    %v351 = vpack.c.b16 %v327, %v326
    %v352 = vpack.c.b16 %v329, %v328
    %v353 = vpack.c.b16 %v331, %v330
    %v354 = vpack.c.b16 %v333, %v332
    %v355 = vpack.c.b16 %v335, %v334
    %v356 = vpack.c.b16 %v337, %v336
    %v357 = vpack.c.b16 %v339, %v338
    %v358 = vpack.c.b16 %v341, %v340
    %v359 = vpack.c.b16 %v343, %v342
    %376 = vmatpush.bf16.msra.mxu0 %v351
    %377 = vmatpush.bf16.msra.mxu0 %v350
    %378 = vmatpush.bf16.msra.mxu0 %v349
    %379 = vmatpush.bf16.msra.mxu0 %v348
    %380 = vmatpush.bf16.msra.mxu0 %v347
    %381 = vmatpush.bf16.msra.mxu0 %v346
    %382 = vmatpush.bf16.msra.mxu0 %v345
    %383 = vmatpush.bf16.msra.mxu0 %v344
    %384 = vmatmul.bf16.gmra.mxu0 %v246
    %v385 = vpop.f32.mrf.mxu0
    %v386 = vadd.f32 0.0, %v385
    %v387 = vpop.f32.mrf.mxu0
    %388 = vdwg.mxu0
    %389 = vmatpush.bf16.msra.mxu0 %v359
    %390 = vmatpush.bf16.msra.mxu0 %v358
    %391 = vmatpush.bf16.msra.mxu0 %v357
    %392 = vmatpush.bf16.msra.mxu0 %v356
    %393 = vmatpush.bf16.msra.mxu0 %v355
    %394 = vmatpush.bf16.msra.mxu0 %v354
    %395 = vmatpush.bf16.msra.mxu0 %v353
    %396 = vmatpush.bf16.msra.mxu0 %v352
    %397 = vmatmul.bf16.gmra.mxu0 %v247
    %v398 = vpop.f32.mrf.mxu0
    %v399 = vadd.f32 %v386, %v398
    %v400 = vpop.f32.mrf.mxu0
    %401 = vdwg.mxu0
    %v402 = vadd.f32 %v245, %v399
    %403 = vst [vmem:[#allocation10] sm:$0xff] %v402
    // Predicated region
    $region46: #{tpu_custom_call.1} parent=1 // pred_check
      %p404 = pneg %p84
    $region47: #{tpu_custom_call.1} parent=1 // pred_check_branch
      %406 = sbr.rel (%p404) target = $region49
    $region48: #{tpu_custom_call.1} parent=1 // pred_region
      %v407 = vld [vmem:[#allocation10] sm:$0xff]
      %v408 = vld [vmem:[%s5] sm:$0x1]
      %v410 = vperm.slane %v408, 0
      %v412 = vadd.f32 %v407, %v410
      %413 = vst [vmem:[#allocation10] sm:$0xff] %v412
    $region49: #{tpu_custom_call.1} parent=1 // pred_fallthru
      _
    // Predicated region
    $region50: #{tpu_custom_call.1} parent=1 // pred_check
      _
    $region51: #{tpu_custom_call.1} parent=1 // pred_check_branch
      %415 = sbr.rel (0) target = $region53
    $region52: #{tpu_custom_call.1} parent=1 // pred_region
      %417 = vsyncadd [#allocation4], 0
      %s419 = sshll.u32 [#allocation10], 4
      %s420 = int_to_ptr.vmem [resolvable:$true] %s419
      %s421 = sshll.u32 %s6, 4
      %s422 = int_to_ptr.hbm [resolvable:$true] %s421
      %424 = dma.vmem_to_hbm [thread:$0]  %s420, 128, %s422, [#allocation4]
    $region53: #{tpu_custom_call.1} parent=1 // pred_fallthru
      _
    // Predicated region
    $region54: #{tpu_custom_call.1} parent=1 // pred_check
      _
    $region55: #{tpu_custom_call.1} parent=1 // pred_check_branch
      %426 = sbr.rel (0) target = $region57
    $region56: #{tpu_custom_call.1} parent=1 // pred_region
      %428 = dma.done [#allocation4], 128
    $region57: #{tpu_custom_call.1} parent=1 // pred_fallthru
      _
    %429 = vsyncpa [#allocation3], 1
    %430 = vsyncpa [#allocation6], 1
    %431 = vsyncpa [#allocation9], 1
    %432 = vsyncpa [#allocation4], 1

</llo_original>
